<compile_context>
chip_gen: v5e
topology: v5e:2x2
jax: 0.10.0
libtpu: 0.0.40
codegen_flags: <defaults>
</compile_context>

<pallas_src>
import math

import jax
import jax.numpy as jnp
from jax.experimental import pallas as pl
from jax.experimental.pallas import tpu as pltpu

LANE = 128
BF16_BYTES = 2
F32_BYTES = 4


def _round_up(v, m):
    return ((v + m - 1) // m) * m


def _pick_tile(n):
    """Largest tile from {1024, 512, 256, 128} not exceeding n; else the full extent.

    1024-wide bf16 adj tiles are 2 MiB (4 MiB double-buffered), comfortably inside the
    default scoped VMEM on v5e (16 MiB), v6e (32 MiB) and v7x (32 MiB scoped / 64 MiB phys).
    Bigger tiles amortize the ~0.35 us per-grid-step overhead and keep DMAs long.
    """
    for t in (1024, 512, 256, 128):
        if n >= t:
            return t
    return n


def _vmem_limit(*buf_bytes):
    """Double-buffered pipeline buffers + headroom, clamped to a safe range."""
    needed = sum(2 * int(b) for b in buf_bytes) + (8 << 20)
    return int(min(max(needed, 16 << 20), 48 << 20))


# ---------------------------------------------------------------------------
# Kernel 1: Z1 = x @ W1p   (feature transform done once; weights stay resident)
# ---------------------------------------------------------------------------
def _transform_kernel(x_ref, w_ref, z_ref):
    z_ref[...] = jnp.dot(
        x_ref[...], w_ref[...], preferred_element_type=jnp.float32
    ).astype(z_ref.dtype)


# ---------------------------------------------------------------------------
# Kernel 2: Z2 = relu(adj @ Z1) @ W2p   (tiled aggregation + fused 2nd transform)
# ---------------------------------------------------------------------------
def _agg_relu_transform_kernel(adj_ref, z1_ref, w2_ref, z2_ref, acc_ref):
    k = pl.program_id(1)

    @pl.when(k == 0)
    def _():
        acc_ref[...] = jnp.zeros_like(acc_ref)

    acc_ref[...] += jnp.dot(
        adj_ref[...], z1_ref[...], preferred_element_type=jnp.float32
    )

    @pl.when(k == pl.num_programs(1) - 1)
    def _():
        h = jnp.maximum(acc_ref[...], 0.0).astype(w2_ref.dtype)   # bf16 MXU input
        z2_ref[...] = jnp.dot(
            h, w2_ref[...], preferred_element_type=jnp.float32
        ).astype(z2_ref.dtype)


# ---------------------------------------------------------------------------
# Kernel 3: out = adj @ Z2   (tiled aggregation; 0.5 already folded into W2p)
# ---------------------------------------------------------------------------
def _agg_kernel(adj_ref, z2_ref, out_ref, acc_ref):
    k = pl.program_id(1)

    @pl.when(k == 0)
    def _():
        acc_ref[...] = jnp.zeros_like(acc_ref)

    acc_ref[...] += jnp.dot(
        adj_ref[...], z2_ref[...], preferred_element_type=jnp.float32
    )

    @pl.when(k == pl.num_programs(1) - 1)
    def _():
        out_ref[...] = acc_ref[...].astype(out_ref.dtype)


# ---------------------------------------------------------------------------
# Wrapper
# ---------------------------------------------------------------------------
def average_ensemble(adj, x, w11, w12, w21, w22, *, tm=None, tk=None):
    n, f = x.shape
    hidden = w11.shape[1]
    num_classes = w12.shape[1]

    hp = _round_up(2 * hidden, LANE)    # fused hidden width, padded lane-dense
    cp = _round_up(num_classes, LANE)   # class width, padded lane-dense

    tm = _pick_tile(n) if tm is None else tm
    tk = _pick_tile(n) if tk is None else tk

    # Zero-pad N so both tile sizes divide it (zero adj rows/cols contribute nothing).
    np_ = _round_up(n, math.lcm(tm, tk))
    if np_ != n:
        adj = jnp.pad(adj, ((0, np_ - n), (0, np_ - n)))
        x = jnp.pad(x, ((0, np_ - n), (0, 0)))

    # Fused + zero-padded weights: W1p = [w11 | w21 | 0], W2p = 0.5 * [[w12],[w22],[0]]
    w1p = jnp.zeros((f, hp), jnp.float32)
    w1p = w1p.at[:, :hidden].set(w11).at[:, hidden:2 * hidden].set(w21)
    w2p = jnp.zeros((hp, cp), jnp.float32)
    w2p = w2p.at[:hidden, :num_classes].set(0.5 * w12)
    w2p = w2p.at[hidden:2 * hidden, :num_classes].set(0.5 * w22)

    # bf16 MXU inputs, f32 accumulation inside the kernels.
    adj_b = adj.astype(jnp.bfloat16)
    x_b = x.astype(jnp.bfloat16)
    w1p_b = w1p.astype(jnp.bfloat16)
    w2p_b = w2p.astype(jnp.bfloat16)

    # --- pass 1: Z1 = x @ W1p -------------------------------------------------
    z1 = pl.pallas_call(
        _transform_kernel,
        out_shape=jax.ShapeDtypeStruct((np_, hp), jnp.bfloat16),
        grid_spec=pltpu.PrefetchScalarGridSpec(
            num_scalar_prefetch=0,
            grid=(np_ // tm,),
            in_specs=[
                pl.BlockSpec((tm, f), lambda i: (i, 0)),
                pl.BlockSpec((f, hp), lambda i: (0, 0)),   # resident weights
            ],
            out_specs=pl.BlockSpec((tm, hp), lambda i: (i, 0)),
        ),
        compiler_params=pltpu.CompilerParams(
            dimension_semantics=("parallel",),
            vmem_limit_bytes=_vmem_limit(
                tm * f * BF16_BYTES, f * hp * BF16_BYTES, tm * hp * BF16_BYTES),
        ),
    )(x_b, w1p_b)

    # --- pass 2: Z2 = relu(adj @ Z1) @ W2p --------------------------------------
    z2 = pl.pallas_call(
        _agg_relu_transform_kernel,
        out_shape=jax.ShapeDtypeStruct((np_, cp), jnp.bfloat16),
        grid_spec=pltpu.PrefetchScalarGridSpec(
            num_scalar_prefetch=0,
            grid=(np_ // tm, np_ // tk),
            in_specs=[
                pl.BlockSpec((tm, tk), lambda i, k: (i, k)),
                pl.BlockSpec((tk, hp), lambda i, k: (k, 0)),
                pl.BlockSpec((hp, cp), lambda i, k: (0, 0)),   # resident weights
            ],
            out_specs=pl.BlockSpec((tm, cp), lambda i, k: (i, 0)),
            scratch_shapes=[pltpu.VMEM((tm, hp), jnp.float32)],
        ),
        compiler_params=pltpu.CompilerParams(
            dimension_semantics=("parallel", "arbitrary"),
            vmem_limit_bytes=_vmem_limit(
                tm * tk * BF16_BYTES, tk * hp * BF16_BYTES, hp * cp * BF16_BYTES,
                tm * cp * BF16_BYTES, tm * hp * F32_BYTES),
        ),
    )(adj_b, z1, w2p_b)

    # --- pass 3: out = adj @ Z2 --------------------------------------------------
    out = pl.pallas_call(
        _agg_kernel,
        out_shape=jax.ShapeDtypeStruct((np_, cp), jnp.float32),
        grid_spec=pltpu.PrefetchScalarGridSpec(
            num_scalar_prefetch=0,
            grid=(np_ // tm, np_ // tk),
            in_specs=[
                pl.BlockSpec((tm, tk), lambda i, k: (i, k)),
                pl.BlockSpec((tk, cp), lambda i, k: (k, 0)),
            ],
            out_specs=pl.BlockSpec((tm, cp), lambda i, k: (i, 0)),
            scratch_shapes=[pltpu.VMEM((tm, cp), jnp.float32)],
        ),
        compiler_params=pltpu.CompilerParams(
            dimension_semantics=("parallel", "arbitrary"),
            vmem_limit_bytes=_vmem_limit(
                tm * tk * BF16_BYTES, tk * cp * BF16_BYTES,
                tm * cp * F32_BYTES, tm * cp * F32_BYTES),
        ),
    )(adj_b, z2)

    return out[:n, :num_classes]


# ---------------------------------------------------------------------------
# Deterministic example inputs
# ---------------------------------------------------------------------------
def make_normalized_adjacency(key, num_nodes, edge_prob=0.1):
    """Dense symmetric adjacency with self loops, D^-1/2 (A+I) D^-1/2."""
    a = (jax.random.uniform(key, (num_nodes, num_nodes)) < edge_prob).astype(jnp.float32)
    a = jnp.maximum(a, a.T)
    a = jnp.minimum(a + jnp.eye(num_nodes, dtype=jnp.float32), 1.0)
    deg = jnp.sum(a, axis=1)
    d_inv_sqrt = 1.0 / jnp.sqrt(deg)
    return a * d_inv_sqrt[:, None] * d_inv_sqrt[None, :]


def glorot(key, shape):
    fan_in, fan_out = shape
    scale = jnp.sqrt(6.0 / (fan_in + fan_out))
    return jax.random.uniform(key, shape, minval=-scale, maxval=scale, dtype=jnp.float32)


if __name__ == "__main__":
    num_nodes, in_feats, hidden, num_classes = 256, 32, 32, 16

    key = jax.random.PRNGKey(0)
    k_adj, k_x, k11, k12, k21, k22 = jax.random.split(key, 6)

    adj = make_normalized_adjacency(k_adj, num_nodes)
    x = jax.random.normal(k_x, (num_nodes, in_feats), dtype=jnp.float32)

    # Deterministic "checkpoint" weights for the two ensemble members.
    w11 = glorot(k11, (in_feats, hidden))
    w12 = glorot(k12, (hidden, num_classes))
    w21 = glorot(k21, (in_feats, hidden))
    w22 = glorot(k22, (hidden, num_classes))

    # tm=tk=128 so the test exercises the multi-tile accumulator path (2x2 grid).
    out = average_ensemble(adj, x, w11, w12, w21, w22, tm=128, tk=128)
    jax.block_until_ready(out)
    assert out.shape == (num_nodes, num_classes)

    # (a) Precision-matched reference (same fused weights, same bf16 casts, f32 accum,
    #     same 0.5 folding into W2): validates the Pallas implementation tightly.
    adj_b = adj.astype(jnp.bfloat16)
    x_b = x.astype(jnp.bfloat16)
    w1 = jnp.concatenate([w11, w21], axis=1).astype(jnp.bfloat16)
    w2 = (0.5 * jnp.concatenate([w12, w22], axis=0)).astype(jnp.bfloat16)
    z1 = jnp.dot(x_b, w1, preferred_element_type=jnp.float32).astype(jnp.bfloat16)
    h = jnp.maximum(jnp.dot(adj_b, z1, preferred_element_type=jnp.float32), 0.0)
    z2 = jnp.dot(h.astype(jnp.bfloat16), w2,
                 preferred_element_type=jnp.float32).astype(jnp.bfloat16)
    ref_matched = jnp.dot(adj_b, z2, preferred_element_type=jnp.float32)
    assert jnp.allclose(out, ref_matched, atol=5e-3, rtol=5e-3), (
        float(jnp.max(jnp.abs(out - ref_matched))))

    # (b) Loose check against the original unfused f32 ensemble semantics:
    #     out = (gcn1(x) + gcn2(x)) / 2
    def gcn_ref(wa, wb):
        hh = jnp.maximum(adj @ (x @ wa), 0.0)
        return adj @ (hh @ wb)

    ref_f32 = (gcn_ref(w11, w12) + gcn_ref(w21, w22)) / 2.0
    assert jnp.allclose(out, ref_f32, atol=5e-2, rtol=5e-2), (
        float(jnp.max(jnp.abs(out - ref_f32))))

    print("KERNEL_OK")
</pallas_src>

<mosaic_0001>
module attributes {stable_mosaic.version = 11 : i64} {
  func.func @_transform_kernel(%arg0: i32, %arg1: memref<128x32xbf16, #tpu.memory_space<vmem>>, %arg2: memref<32x128xbf16, #tpu.memory_space<vmem>>, %arg3: memref<128x128xbf16, #tpu.memory_space<vmem>>) attributes {dimension_semantics = [#tpu.dimension_semantics<parallel>], iteration_bounds = array<i64: 2>, scalar_prefetch = 0 : i64, scratch_operands = 0 : i64, tpu.core_type = #tpu.core_type<tc>, window_params = [{transform_indices = @transform_0, window_bounds = array<i64: 128, 32>}, {pipeline_mode = #tpu.pipeline_mode<synchronous>, transform_indices = @transform_1, window_bounds = array<i64: 32, 128>}, {transform_indices = @transform_2, window_bounds = array<i64: 128, 128>}]} {
    %c0 = arith.constant 0 : index
    %c0_0 = arith.constant 0 : index
    %0 = vector.load %arg1[%c0, %c0_0] : memref<128x32xbf16, #tpu.memory_space<vmem>>, vector<128x32xbf16>
    %c0_1 = arith.constant 0 : index
    %c0_2 = arith.constant 0 : index
    %1 = vector.load %arg2[%c0_1, %c0_2] : memref<32x128xbf16, #tpu.memory_space<vmem>>, vector<32x128xbf16>
    %cst = arith.constant dense<0.000000e+00> : vector<128x128xf32>
    %2 = tpu.matmul %0, %1, %cst {dimension_numbers = #tpu.dot_dimension_numbers<[1], [0], [0], [1], [0, 0, 1, 1], [], []>} : vector<128x32xbf16>, vector<32x128xbf16>, vector<128x128xf32> -> vector<128x128xf32>
    %3 = arith.truncf %2 : vector<128x128xf32> to vector<128x128xbf16>
    %c0_3 = arith.constant 0 : index
    %c0_4 = arith.constant 0 : index
    %4 = vector.load %arg3[%c0_3, %c0_4] : memref<128x128xbf16, #tpu.memory_space<vmem>>, vector<128x128xbf16>
    tpu.vector_store %arg3[%c0_3, %c0_4], %3 {strides = array<i32>} : memref<128x128xbf16, #tpu.memory_space<vmem>>, vector<128x128xbf16>,
    return
  }
  func.func @transform_0(%arg0: i32) -> (i32, i32) {
    %c0_i32 = arith.constant 0 : i32
    %c0_i32_0 = arith.constant 0 : i32
    return %arg0, %c0_i32 : i32, i32
  }
  func.func @transform_1(%arg0: i32) -> (i32, i32) {
    %c0_i32 = arith.constant 0 : i32
    %c0_i32_0 = arith.constant 0 : i32
    %c0_i32_1 = arith.constant 0 : i32
    return %c0_i32, %c0_i32_0 : i32, i32
  }
  func.func @transform_2(%arg0: i32) -> (i32, i32) {
    %c0_i32 = arith.constant 0 : i32
    %c0_i32_0 = arith.constant 0 : i32
    return %arg0, %c0_i32 : i32, i32
  }
}

</mosaic_0001>

<llo_original>
// kernel: tpu_custom_call.1
$region0: #{tpu_custom_call.1}
  #allocation0 [shape = 'u32[]', space=smem, size = 0x4, offset = 0x4, fixed_abs, tag = 'smem constant byte address 0x4 - core index']
  #allocation1 [shape = 'u32[72,128]{1,0:T(1,128)}', space=vmem, size = 0x9000, scoped, tag = 'internal scratch']
  %s0 = inlined_call_operand.vmem [shape: bf16[256,32], index: 0, kind: input, shape index: {}]
  %s1 = inlined_call_operand.vmem [shape: bf16[32,128], index: 1, kind: input, shape index: {}]
  %s2 = inlined_call_operand.hbm [shape: bf16[256,128], index: 2, kind: output, shape index: {}]
  %s3 = sld [smem:[#allocation0]]
  $region41: #{tpu_custom_call.1} parent=0
    _
  %s5 = ssub.s32 1, %s3
  %s6 = scalar_select 0, %s5, %s3
  $region1: #{tpu_custom_call.1} parent=0
    #allocation2 [shape = 'u8[65536]{0}', space=vmem, size = 0x10000, scoped, tag = 'output window, operand 0']
    #allocation3 [shape = 's32[2]{0}', space=sflag, size = 0x8, scoped, tag = 'scoped memory for tpu_custom_call.1']
    %7 = vsyncpa [#allocation3], 0
    %s8 = scalar_lea.sflag [#allocation3], 1
    %9 = vsyncpa %s8, 0
    loop: start=0, step=1, limit=4
    $region2: #{tpu_custom_call.1} parent=1 // loop_pre_header
      _
    $region3: #{tpu_custom_call.1} parent=1 // loop_header
      %s11 = sphi 0, %s15
      %p12 = scmp.ge.s32.totalorder %s11, 4
      %s21 = sphi 0, %s23
      %s24 = sphi 0, %s21
      %s25 = sphi 0, %s24
      %s41 = sphi 0, %s25
      %s45 = sphi 0, %s45
      %s47 = sphi 0, %s45
      %s48 = sphi 0, %s47
      %s62 = sphi 0, %s48
      %s68 = sphi 0, %s70
      %s71 = sphi 0, %s68
      %s72 = sphi 0, %s71
      %s88 = sphi 0, %s72
    $region4: #{tpu_custom_call.1} parent=1 // loop_header_branch
      %14 = sbr.rel (%p12) target = $region8
    $region5: #{tpu_custom_call.1} parent=1 // loop_body
      %s16 = ssub.s32 %s11, 1
      %s17 = ssub.s32 %s11, 2
      %s18 = sadd.s32 %s11, 1
      %s19 = ssub.s32 %s11, %s18
      %p20 = scmp.eq.s32.totalorder %s19, 0
      %s22 = sadd.s32 %s21, 1
      %s23 = scalar_select %p20, %s21, %s22
      %p26 = pneg %p20
      %p27 = scmp.eq.s32.totalorder %s11, 1
      %p28 = por %p26, %p27
      %p29 = scmp.ne.s32.totalorder %s21, %s24
      %p30 = scmp.eq.s32.totalorder %s11, 0
      %p31 = por %p29, %p30
      %p32 = scmp.ne.s32.totalorder %s21, %s24
      %p33 = scmp.eq.s32.totalorder %s16, 1
      %p34 = por %p32, %p33
      %p35 = scmp.ne.s32.totalorder %s24, %s25
      %p36 = scmp.eq.s32.totalorder %s16, 0
      %p37 = por %p35, %p36
      %p38 = scmp.ne.s32.totalorder %s24, %s25
      %p39 = scmp.eq.s32.totalorder %s17, 1
      %p40 = por %p38, %p39
      %p42 = scmp.ne.s32.totalorder %s25, %s41
      %p43 = scmp.eq.s32.totalorder %s17, 0
      %p44 = por %p42, %p43
      %s46 = sadd.s32 %s45, 1
      %p49 = scmp.eq.s32.totalorder %s11, 1
      %p50 = scmp.ne.s32.totalorder %s45, %s47
      %p51 = scmp.eq.s32.totalorder %s11, 0
      %p52 = por %p50, %p51
      %p53 = scmp.ne.s32.totalorder %s45, %s47
      %p54 = scmp.eq.s32.totalorder %s16, 1
      %p55 = por %p53, %p54
      %p56 = scmp.ne.s32.totalorder %s47, %s48
      %p57 = scmp.eq.s32.totalorder %s16, 0
      %p58 = por %p56, %p57
      %p59 = scmp.ne.s32.totalorder %s47, %s48
      %p60 = scmp.eq.s32.totalorder %s17, 1
      %p61 = por %p59, %p60
      %p63 = scmp.ne.s32.totalorder %s48, %s62
      %p64 = scmp.eq.s32.totalorder %s17, 0
      %p65 = por %p63, %p64
      %s66 = ssub.s32 %s11, %s18
      %p67 = scmp.eq.s32.totalorder %s66, 0
      %s69 = sadd.s32 %s68, 1
      %s70 = scalar_select %p67, %s68, %s69
      %p73 = pneg %p67
      %p74 = scmp.eq.s32.totalorder %s11, 1
      %p75 = por %p73, %p74
      %p76 = scmp.ne.s32.totalorder %s68, %s71
      %p77 = scmp.eq.s32.totalorder %s11, 0
      %p78 = por %p76, %p77
      %p79 = scmp.ne.s32.totalorder %s68, %s71
      %p80 = scmp.eq.s32.totalorder %s16, 1
      %p81 = por %p79, %p80
      %p82 = scmp.ne.s32.totalorder %s71, %s72
      %p83 = scmp.eq.s32.totalorder %s16, 0
      %p84 = por %p82, %p83
      %p85 = scmp.ne.s32.totalorder %s71, %s72
      %p86 = scmp.eq.s32.totalorder %s17, 1
      %p87 = por %p85, %p86
      %p89 = scmp.ne.s32.totalorder %s72, %s88
      %p90 = scmp.eq.s32.totalorder %s17, 0
      %p91 = por %p89, %p90
      %p92 = scmp.le.s32.totalorder 1, %s11
      %p93 = scmp.lt.s32.totalorder %s11, 3
      %p94 = pnand %p92, %p93
      %p95 = pneg %p94
      // Predicated region
      $region9: #{tpu_custom_call.1} parent=5 // pred_check
        _
      $region10: #{tpu_custom_call.1} parent=5 // pred_check_branch
        %97 = sbr.rel (%p94) target = $region12
      $region11: #{tpu_custom_call.1} parent=5 // pred_region
        %s98 = ssub.s32 %s11, 1
        // Predicated region
        $region13: #{tpu_custom_call.1} parent=11 // pred_check
          %p99 = pneg %p58
        $region14: #{tpu_custom_call.1} parent=11 // pred_check_branch
          %101 = sbr.rel (%p99) target = $region16
        $region15: #{tpu_custom_call.1} parent=11 // pred_region
          _
        $region16: #{tpu_custom_call.1} parent=11 // pred_fallthru
          _
      $region12: #{tpu_custom_call.1} parent=5 // pred_fallthru
        _
      %p102 = scmp.lt.s32.totalorder %s11, 2
      // Predicated region
      $region17: #{tpu_custom_call.1} parent=5 // pred_check
        %p103 = pneg %p102
      $region18: #{tpu_custom_call.1} parent=5 // pred_check_branch
        %105 = sbr.rel (%p103) target = $region20
      $region19: #{tpu_custom_call.1} parent=5 // pred_region
        // Predicated region
        $region21: #{tpu_custom_call.1} parent=19 // pred_check
          %p106 = pneg %p31
        $region22: #{tpu_custom_call.1} parent=19 // pred_check_branch
          %108 = sbr.rel (%p106) target = $region24
        $region23: #{tpu_custom_call.1} parent=19 // pred_region
          %s109 = smul.u32 16, %s11
          %p110 = scmp.lt.s32.totalorder %s109, 31
          %s111 = scalar_select %p110, %s109, 31
          %s112 = smul.addr %s111, 4
          %s113 = scalar_lea.vmem %s0, %s112
          %s114 = smul.u32 16, %s11
        $region24: #{tpu_custom_call.1} parent=19 // pred_fallthru
          _
      $region20: #{tpu_custom_call.1} parent=5 // pred_fallthru
        _
      %p115 = scmp.le.s32.totalorder 1, %s11
      %p116 = scmp.lt.s32.totalorder %s11, 3
      %p117 = pnand %p115, %p116
      %p118 = pneg %p117
      // Predicated region
      $region25: #{tpu_custom_call.1} parent=5 // pred_check
        _
      $region26: #{tpu_custom_call.1} parent=5 // pred_check_branch
        %120 = sbr.rel (%p117) target = $region28
      $region27: #{tpu_custom_call.1} parent=5 // pred_region
        %s121 = ssub.s32 %s11, 1
        %s122 = smul.u32 16, %s16
        %p123 = scmp.lt.s32.totalorder %s122, 31
        %s124 = scalar_select %p123, %s122, 31
        %s125 = smul.addr %s124, 4
        %s126 = scalar_lea.vmem %s0, %s125
        %p127 = pneg %p37
        %p128 = pneg %p34
        %p129 = pneg %p58
        %p130 = pneg %p55
        %p131 = pneg %p84
        %p132 = pneg %p81
        %s133 = sand.u32 %s71, 1
        %s134 = scalar_lea.sflag [#allocation3], %s133
        %s135 = sand.u32 %s71, 1
        %s136 = smul.addr %s135, 64
        %s137 = scalar_lea.vmem [#allocation2], %s136
        %s138 = smul.u32 16, %s16
        %p139 = scmp.lt.s32.totalorder %s138, 31
        %s140 = scalar_select %p139, %s138, 31
        %s141 = smul.addr %s140, 4
        %s142 = scalar_lea.vmem %s0, %s141
        %s143 = smul.u32 16, %s16
        %s144 = smul.u32 16, %s16
        %v146 = vld [vmem:[%s142] sm:$0xf]
        %v147 = vld [vmem:[%s142 + $0x4] sm:$0xf]
        %v148 = vld [vmem:[%s142 + $0x8] sm:$0xf]
        %v149 = vld [vmem:[%s142 + $0xc] sm:$0xf]
        %v150 = vld [vmem:[%s142 + $0x10] sm:$0xf]
        %v151 = vld [vmem:[%s142 + $0x14] sm:$0xf]
        %v152 = vld [vmem:[%s142 + $0x18] sm:$0xf]
        %v153 = vld [vmem:[%s142 + $0x1c] sm:$0xf]
        %v154 = vld [vmem:[%s142 + $0x20] sm:$0xf]
        %v155 = vld [vmem:[%s142 + $0x24] sm:$0xf]
        %v156 = vld [vmem:[%s142 + $0x28] sm:$0xf]
        %v157 = vld [vmem:[%s142 + $0x2c] sm:$0xf]
        %v158 = vld [vmem:[%s142 + $0x30] sm:$0xf]
        %v159 = vld [vmem:[%s142 + $0x34] sm:$0xf]
        %v160 = vld [vmem:[%s142 + $0x38] sm:$0xf]
        %v161 = vld [vmem:[%s142 + $0x3c] sm:$0xf]
        %v162 = vld [vmem:[%s1] sm:$0xf]
        %v163 = vld [vmem:[%s1 + $0x4] sm:$0xf]
        %v164 = vld [vmem:[%s1 + $0x8] sm:$0xf]
        %v165 = vld [vmem:[%s1 + $0xc] sm:$0xf]
        %v182 = vunpack.c.l.b16 %v146
        %v183 = vunpack.c.l.b16 %v147
        %v184 = vunpack.c.l.b16 %v148
        %v185 = vunpack.c.l.b16 %v149
        %v186 = vunpack.c.l.b16 %v150
        %v187 = vunpack.c.l.b16 %v151
        %v188 = vunpack.c.l.b16 %v152
        %v189 = vunpack.c.l.b16 %v153
        %v190 = vunpack.c.l.b16 %v154
        %v191 = vunpack.c.l.b16 %v155
        %v192 = vunpack.c.l.b16 %v156
        %v193 = vunpack.c.l.b16 %v157
        %v194 = vunpack.c.l.b16 %v158
        %v195 = vunpack.c.l.b16 %v159
        %v196 = vunpack.c.l.b16 %v160
        %v197 = vunpack.c.l.b16 %v161
        %v198 = vpack.c.b16 %v183, %v182
        %v199 = vpack.c.b16 %v185, %v184
        %v200 = vpack.c.b16 %v187, %v186
        %v201 = vpack.c.b16 %v189, %v188
        %v202 = vpack.c.b16 %v191, %v190
        %v203 = vpack.c.b16 %v193, %v192
        %v204 = vpack.c.b16 %v195, %v194
        %v205 = vpack.c.b16 %v197, %v196
        %v210 = vunpack.c.l.b16 %v162
        %v211 = vunpack.c.l.b16 %v163
        %v212 = vunpack.c.l.b16 %v164
        %v213 = vunpack.c.l.b16 %v165
        %v214 = vpack.c.b16 %v211, %v210
        %v215 = vpack.c.b16 %v213, %v212
        %vm218 = vcmask 261120
        %v220 = vsel %vm218, %v198, 0
        %v223 = vsel %vm218, %v199, 0
        %v226 = vsel %vm218, %v200, 0
        %v229 = vsel %vm218, %v201, 0
        %v232 = vsel %vm218, %v202, 0
        %v235 = vsel %vm218, %v203, 0
        %v238 = vsel %vm218, %v204, 0
        %v241 = vsel %vm218, %v205, 0
        %243 = vmatpush.bf16.msra.mxu0 0
        %244 = vmatpush.bf16.msra.mxu0 0
        %245 = vmatpush.bf16.msra.mxu0 0
        %246 = vmatpush.bf16.msra.mxu0 0
        %247 = vmatpush.bf16.msra.mxu0 0
        %248 = vmatpush.bf16.msra.mxu0 0
        %249 = vmatpush.bf16.msra.mxu0 %v215
        %250 = vmatpush.bf16.msra.mxu0 %v214
        %251 = vmatmul.bf16.gmra.mxu0 %v220
        %v252 = vpop.f32.mrf.mxu0
        %v253 = vadd.f32 0.0, %v252
        %v254 = vpop.f32.mrf.mxu0
        %v255 = vadd.f32 0.0, %v254
        %256 = vmatmul.bf16.gmra.mxu0 %v223
        %v257 = vpop.f32.mrf.mxu0
        %v258 = vadd.f32 0.0, %v257
        %v259 = vpop.f32.mrf.mxu0
        %v260 = vadd.f32 0.0, %v259
        %261 = vmatmul.bf16.gmra.mxu0 %v226
        %v262 = vpop.f32.mrf.mxu0
        %v263 = vadd.f32 0.0, %v262
        %v264 = vpop.f32.mrf.mxu0
        %v265 = vadd.f32 0.0, %v264
        %266 = vmatmul.bf16.gmra.mxu0 %v229
        %v267 = vpop.f32.mrf.mxu0
        %v268 = vadd.f32 0.0, %v267
        %v269 = vpop.f32.mrf.mxu0
        %v270 = vadd.f32 0.0, %v269
        %271 = vmatmul.bf16.gmra.mxu0 %v232
        %v272 = vpop.f32.mrf.mxu0
        %v273 = vadd.f32 0.0, %v272
        %v274 = vpop.f32.mrf.mxu0
        %v275 = vadd.f32 0.0, %v274
        %276 = vmatmul.bf16.gmra.mxu0 %v235
        %v277 = vpop.f32.mrf.mxu0
        %v278 = vadd.f32 0.0, %v277
        %v279 = vpop.f32.mrf.mxu0
        %v280 = vadd.f32 0.0, %v279
        %281 = vmatmul.bf16.gmra.mxu0 %v238
        %v282 = vpop.f32.mrf.mxu0
        %v283 = vadd.f32 0.0, %v282
        %v284 = vpop.f32.mrf.mxu0
        %v285 = vadd.f32 0.0, %v284
        %286 = vmatmul.bf16.gmra.mxu0 %v241
        %v287 = vpop.f32.mrf.mxu0
        %v288 = vadd.f32 0.0, %v287
        %v289 = vpop.f32.mrf.mxu0
        %v290 = vadd.f32 0.0, %v289
        %291 = vdwg.mxu0
        %v292 = vpack.c.bf16 %v253, %v253
        %v293 = vpack.c.bf16 %v255, %v255
        %v294 = vpack.c.bf16 %v258, %v258
        %v295 = vpack.c.bf16 %v260, %v260
        %v296 = vpack.c.bf16 %v263, %v263
        %v297 = vpack.c.bf16 %v265, %v265
        %v298 = vpack.c.bf16 %v268, %v268
        %v299 = vpack.c.bf16 %v270, %v270
        %v300 = vpack.c.bf16 %v273, %v273
        %v301 = vpack.c.bf16 %v275, %v275
        %v302 = vpack.c.bf16 %v278, %v278
        %v303 = vpack.c.bf16 %v280, %v280
        %v304 = vpack.c.bf16 %v283, %v283
        %v305 = vpack.c.bf16 %v285, %v285
        %v306 = vpack.c.bf16 %v288, %v288
        %v307 = vpack.c.bf16 %v290, %v290
        %308 = vst [vmem:[%s137] sm:$0xf] %v292
        %309 = vst [vmem:[%s137 + $0x4] sm:$0xf] %v293
        %310 = vst [vmem:[%s137 + $0x8] sm:$0xf] %v294
        %311 = vst [vmem:[%s137 + $0xc] sm:$0xf] %v295
        %312 = vst [vmem:[%s137 + $0x10] sm:$0xf] %v296
        %313 = vst [vmem:[%s137 + $0x14] sm:$0xf] %v297
        %314 = vst [vmem:[%s137 + $0x18] sm:$0xf] %v298
        %315 = vst [vmem:[%s137 + $0x1c] sm:$0xf] %v299
        %316 = vst [vmem:[%s137 + $0x20] sm:$0xf] %v300
        %317 = vst [vmem:[%s137 + $0x24] sm:$0xf] %v301
        %318 = vst [vmem:[%s137 + $0x28] sm:$0xf] %v302
        %319 = vst [vmem:[%s137 + $0x2c] sm:$0xf] %v303
        %320 = vst [vmem:[%s137 + $0x30] sm:$0xf] %v304
        %321 = vst [vmem:[%s137 + $0x34] sm:$0xf] %v305
        %322 = vst [vmem:[%s137 + $0x38] sm:$0xf] %v306
        %323 = vst [vmem:[%s137 + $0x3c] sm:$0xf] %v307
        %s324 = sand.u32 %s71, 1
        %s325 = scalar_lea.sflag [#allocation3], %s324
        %s326 = sand.u32 %s71, 1
        %s327 = smul.addr %s326, 64
        %s328 = scalar_lea.vmem [#allocation2], %s327
        // Predicated region
        $region29: #{tpu_custom_call.1} parent=27 // pred_check
          %p329 = pneg %p81
        $region30: #{tpu_custom_call.1} parent=27 // pred_check_branch
          %331 = sbr.rel (%p329) target = $region32
        $region31: #{tpu_custom_call.1} parent=27 // pred_region
          %s332 = smul.u32 16, %s16
          %334 = vsyncadd %s325, 0
          %s335 = smul.addr %s332, 4
          %s336 = scalar_lea.hbm %s2, %s335
          %s337 = sshll.u32 %s328, 4
          %s338 = int_to_ptr.vmem [resolvable:$true] %s337
          %s339 = sshll.u32 %s336, 4
          %s340 = int_to_ptr.hbm [resolvable:$true] %s339
          %345 = dma.vmem_to_hbm [thread:$0]  %s338, 1024, %s340, %s325, 64, 64, 4
        $region32: #{tpu_custom_call.1} parent=27 // pred_fallthru
          _
      $region28: #{tpu_custom_call.1} parent=5 // pred_fallthru
        _
      %p346 = scmp.le.s32.totalorder 2, %s11
      // Predicated region
      $region33: #{tpu_custom_call.1} parent=5 // pred_check
        %p347 = pneg %p346
      $region34: #{tpu_custom_call.1} parent=5 // pred_check_branch
        %349 = sbr.rel (%p347) target = $region36
      $region35: #{tpu_custom_call.1} parent=5 // pred_region
        %s350 = ssub.s32 %s11, 2
        // Predicated region
        $region37: #{tpu_custom_call.1} parent=35 // pred_check
          %p351 = pneg %p87
        $region38: #{tpu_custom_call.1} parent=35 // pred_check_branch
          %353 = sbr.rel (%p351) target = $region40
        $region39: #{tpu_custom_call.1} parent=35 // pred_region
          %s354 = sand.u32 %s72, 1
          %s355 = scalar_lea.sflag [#allocation3], %s354
          %s356 = sand.u32 %s72, 1
          %s357 = smul.addr %s356, 64
          %s358 = scalar_lea.vmem [#allocation2], %s357
          %360 = dma.done %s355, 1024
        $region40: #{tpu_custom_call.1} parent=35 // pred_fallthru
          _
      $region36: #{tpu_custom_call.1} parent=5 // pred_fallthru
        _
    $region6: #{tpu_custom_call.1} parent=1 // loop_footer
      %s15 = sadd.s32 1, %s11
    $region7: #{tpu_custom_call.1} parent=1 // loop_footer_branch
      %10 = sbr.rel target = $region3
    $region8: #{tpu_custom_call.1} parent=1 // loop_exit
      _
    %361 = vsyncpa [#allocation3], 1
    %s362 = scalar_lea.sflag [#allocation3], 1
    %363 = vsyncpa %s362, 1

</llo_original>
